<compile_context>
chip_gen: v5e
topology: v5e:2x2
jax: 0.10.0
libtpu: 0.0.40
codegen_flags: <defaults>
</compile_context>

<pallas_src>
import jax
import jax.numpy as jnp
from jax import lax
from jax.experimental import pallas as pl
from jax.experimental.pallas import tpu as pltpu

_LANE = 128
_SUBLANE = 8
# 4096 rows x 128 lanes x 4 B = 2 MiB per f32 input block.
_MAX_BLOCK_ROWS = 4096


def _make_kernel(block_rows, rows_valid, needs_mask):
    def kernel(pred_ref, gt_ref, loss_ref, npos_ref):
        pred = pred_ref[...].astype(jnp.float32)
        gt = gt_ref[...].astype(jnp.float32)

        if needs_mask:
            # Last grid block may be ragged: rows >= rows_valid hold garbage.
            # Replace with values that contribute exactly zero
            # (gt=2 -> neither pos nor neg; pred=0.5 -> finite log).
            row = lax.broadcasted_iota(jnp.int32, (block_rows, _LANE), 0)
            valid = pl.program_id(0) * block_rows + row < rows_valid
            gt = jnp.where(valid, gt, 2.0)
            pred = jnp.where(valid, pred, 0.5)

        pos = gt == 1.0
        neg = gt < 1.0
        p = jnp.clip(pred, 1e-6, 1.0 - 1e-6)

        # pos/neg are disjoint -> single fused log:
        #   pos:  log(p)   * (1-p)^2
        #   neg:  log(1-p) * p^2 * (1-gt)^4
        one_m_p = 1.0 - p
        q = jnp.where(pos, p, one_m_p)
        w = jnp.where(pos, one_m_p * one_m_p,
                      jnp.where(neg, (1.0 - gt) ** 4 * p * p, 0.0))
        loss = jnp.log(q) * w
        pos_f = pos.astype(jnp.float32)

        # Per-block lane-dense partials: reduce (block_rows,128) -> (8,128)
        # with VPU adds over the leading axis (no per-step scalar reduction).
        k = block_rows // _SUBLANE
        loss_ref[0, :, :] = loss.reshape(k, _SUBLANE, _LANE).sum(axis=0)
        npos_ref[0, :, :] = pos_f.reshape(k, _SUBLANE, _LANE).sum(axis=0)

    return kernel


def focal_loss(pred, gt):
    """Modified focal loss (CornerNet). pred, gt: (B, C, H, W) arrays."""
    assert pred.shape == gt.shape
    n = pred.size
    assert n > 0

    pred_flat = jnp.ravel(pred)
    gt_flat = jnp.ravel(gt)

    rows_needed = -(-n // _LANE)  # cdiv
    if rows_needed <= _MAX_BLOCK_ROWS:
        # Small input: a single block; round rows up to a multiple of 8.
        block_rows = -(-rows_needed // _SUBLANE) * _SUBLANE
        rows = block_rows
        needs_mask = False
    else:
        block_rows = _MAX_BLOCK_ROWS
        rows = rows_needed
        needs_mask = (rows % block_rows) != 0

    n_target = rows * _LANE
    if n_target != n:
        # Large inputs with n % 128 == 0 (the common case) take no copy here;
        # otherwise the pad is at most 127 elements (or a tiny single block).
        pad = n_target - n
        pred_flat = jnp.pad(pred_flat, (0, pad), constant_values=0.5)
        gt_flat = jnp.pad(gt_flat, (0, pad), constant_values=2.0)

    pred2d = pred_flat.reshape(rows, _LANE)
    gt2d = gt_flat.reshape(rows, _LANE)

    grid_size = -(-rows // block_rows)
    kernel = _make_kernel(block_rows, rows, needs_mask)

    in_spec = pl.BlockSpec((block_rows, _LANE), lambda i: (i, 0))
    out_spec = pl.BlockSpec((1, _SUBLANE, _LANE), lambda i: (i, 0, 0))
    out_shape = (
        jax.ShapeDtypeStruct((grid_size, _SUBLANE, _LANE), jnp.float32),
        jax.ShapeDtypeStruct((grid_size, _SUBLANE, _LANE), jnp.float32),
    )

    n_elems = rows * _LANE
    cost = pl.CostEstimate(
        flops=15 * n_elems,
        transcendentals=n_elems,
        bytes_accessed=(n_elems * (pred2d.dtype.itemsize + gt2d.dtype.itemsize)
                        + 2 * grid_size * _SUBLANE * _LANE * 4),
    )

    loss_parts, npos_parts = pl.pallas_call(
        kernel,
        out_shape=out_shape,
        grid_spec=pltpu.PrefetchScalarGridSpec(
            num_scalar_prefetch=0,
            grid=(grid_size,),
            in_specs=[in_spec, in_spec],
            out_specs=(out_spec, out_spec),
        ),
        compiler_params=pltpu.CompilerParams(
            dimension_semantics=("parallel",)),
        cost_estimate=cost,
    )(pred2d, gt2d)

    total = jnp.sum(loss_parts)
    num_pos = jnp.sum(npos_parts)
    # When num_pos == 0 the positive term is necessarily 0, so the PyTorch
    # if/else collapses to a single expression.
    return -total / jnp.maximum(num_pos, 1.0)


def _reference(pred, gt):
    pred = pred.astype(jnp.float32)
    gt = gt.astype(jnp.float32)
    pos_inds = (gt == 1.0).astype(jnp.float32)
    neg_inds = (gt < 1.0).astype(jnp.float32)
    neg_weights = (1.0 - gt) ** 4
    p = jnp.clip(pred, 1e-6, 1.0 - 1e-6)
    pos_loss = jnp.sum(jnp.log(p) * (1.0 - p) ** 2 * pos_inds)
    neg_loss = jnp.sum(jnp.log(1.0 - p) * p ** 2 * neg_weights * neg_inds)
    num_pos = jnp.sum(pos_inds)
    return jnp.where(num_pos == 0.0, -neg_loss,
                     -(pos_loss + neg_loss) / jnp.maximum(num_pos, 1.0))


if __name__ == "__main__":
    key = jax.random.PRNGKey(0)
    k1, k2 = jax.random.split(key)

    B, C, H, W = 2, 4, 16, 16
    # pred: probabilities in (0, 1)
    pred = jax.nn.sigmoid(jax.random.normal(k1, (B, C, H, W), jnp.float32))
    # gt: gaussian-splat style heatmap in [0, 1] with a few exact 1.0 peaks
    gt = jax.random.uniform(k2, (B, C, H, W), jnp.float32)
    gt = gt.at[0, 0, 3, 5].set(1.0)
    gt = gt.at[1, 2, 8, 8].set(1.0)
    gt = gt.at[1, 3, 12, 1].set(1.0)

    out = focal_loss(pred, gt)
    out = jax.block_until_ready(out)

    ref = _reference(pred, gt)
    assert jnp.allclose(out, ref, rtol=1e-5, atol=1e-5), (out, ref)

    print("KERNEL_OK")
</pallas_src>

<mosaic_0001>
module attributes {stable_mosaic.version = 11 : i64} {
  func.func @kernel(%arg0: i32, %arg1: memref<16x128xf32, #tpu.memory_space<vmem>>, %arg2: memref<16x128xf32, #tpu.memory_space<vmem>>, %arg3: memref<1x8x128xf32, #tpu.memory_space<vmem>>, %arg4: memref<1x8x128xf32, #tpu.memory_space<vmem>>) attributes {dimension_semantics = [#tpu.dimension_semantics<parallel>], iteration_bounds = array<i64: 1>, scalar_prefetch = 0 : i64, scratch_operands = 0 : i64, tpu.core_type = #tpu.core_type<tc>, window_params = [{transform_indices = @transform_0, window_bounds = array<i64: 16, 128>}, {transform_indices = @transform_1, window_bounds = array<i64: 16, 128>}, {transform_indices = @transform_2, window_bounds = array<i64: 1, 8, 128>}, {transform_indices = @transform_3, window_bounds = array<i64: 1, 8, 128>}]} {
    %c0 = arith.constant 0 : index
    %c0_0 = arith.constant 0 : index
    %0 = vector.load %arg1[%c0, %c0_0] : memref<16x128xf32, #tpu.memory_space<vmem>>, vector<16x128xf32>
    %c0_1 = arith.constant 0 : index
    %c0_2 = arith.constant 0 : index
    %1 = vector.load %arg2[%c0_1, %c0_2] : memref<16x128xf32, #tpu.memory_space<vmem>>, vector<16x128xf32>
    %cst = arith.constant 1.000000e+00 : f32
    %2 = vector.broadcast %cst : f32 to vector<16x128xf32>
    %3 = arith.cmpf oeq, %1, %2 : vector<16x128xf32>
    %cst_3 = arith.constant 1.000000e+00 : f32
    %4 = vector.broadcast %cst_3 : f32 to vector<16x128xf32>
    %5 = arith.cmpf olt, %1, %4 : vector<16x128xf32>
    %cst_4 = arith.constant 9.99999997E-7 : f32
    %cst_5 = arith.constant 0.999998986 : f32
    %6 = vector.broadcast %cst_4 : f32 to vector<16x128xf32>
    %7 = arith.maximumf %6, %0 : vector<16x128xf32>
    %8 = vector.broadcast %cst_5 : f32 to vector<16x128xf32>
    %9 = arith.minimumf %8, %7 : vector<16x128xf32>
    %cst_6 = arith.constant 1.000000e+00 : f32
    %10 = vector.broadcast %cst_6 : f32 to vector<16x128xf32>
    %11 = arith.subf %10, %9 : vector<16x128xf32>
    %12 = arith.select %3, %9, %11 : vector<16x128xi1>, vector<16x128xf32>
    %13 = arith.mulf %11, %11 : vector<16x128xf32>
    %cst_7 = arith.constant 1.000000e+00 : f32
    %14 = vector.broadcast %cst_7 : f32 to vector<16x128xf32>
    %15 = arith.subf %14, %1 : vector<16x128xf32>
    %16 = arith.mulf %15, %15 : vector<16x128xf32>
    %17 = arith.mulf %16, %16 : vector<16x128xf32>
    %18 = arith.mulf %17, %9 : vector<16x128xf32>
    %19 = arith.mulf %18, %9 : vector<16x128xf32>
    %cst_8 = arith.constant 0.000000e+00 : f32
    %20 = vector.broadcast %cst_8 : f32 to vector<16x128xf32>
    %21 = arith.select %5, %19, %20 : vector<16x128xi1>, vector<16x128xf32>
    %22 = arith.select %3, %13, %21 : vector<16x128xi1>, vector<16x128xf32>
    %23 = math.log %12 : vector<16x128xf32>
    %24 = arith.mulf %23, %22 : vector<16x128xf32>
    %25 = arith.extui %3 : vector<16x128xi1> to vector<16x128xi32>
    %26 = arith.sitofp %25 : vector<16x128xi32> to vector<16x128xf32>
    %27 = vector.shape_cast %24 : vector<16x128xf32> to vector<2x8x128xf32>
    %cst_9 = arith.constant dense<0.000000e+00> : vector<8x128xf32>
    %28 = vector.multi_reduction <add>, %27, %cst_9 [0] : vector<2x8x128xf32> to vector<8x128xf32>
    %c0_10 = arith.constant 0 : index
    %c0_11 = arith.constant 0 : index
    %c0_12 = arith.constant 0 : index
    %29 = vector.load %arg3[%c0_10, %c0_11, %c0_12] : memref<1x8x128xf32, #tpu.memory_space<vmem>>, vector<1x8x128xf32>
    %30 = vector.shape_cast %29 : vector<1x8x128xf32> to vector<8x128xf32>
    %31 = vector.shape_cast %28 : vector<8x128xf32> to vector<1x8x128xf32>
    tpu.vector_store %arg3[%c0_10, %c0_11, %c0_12], %31 {strides = array<i32>} : memref<1x8x128xf32, #tpu.memory_space<vmem>>, vector<1x8x128xf32>,
    %32 = vector.shape_cast %26 : vector<16x128xf32> to vector<2x8x128xf32>
    %cst_13 = arith.constant dense<0.000000e+00> : vector<8x128xf32>
    %33 = vector.multi_reduction <add>, %32, %cst_13 [0] : vector<2x8x128xf32> to vector<8x128xf32>
    %c0_14 = arith.constant 0 : index
    %c0_15 = arith.constant 0 : index
    %c0_16 = arith.constant 0 : index
    %34 = vector.load %arg4[%c0_14, %c0_15, %c0_16] : memref<1x8x128xf32, #tpu.memory_space<vmem>>, vector<1x8x128xf32>
    %35 = vector.shape_cast %34 : vector<1x8x128xf32> to vector<8x128xf32>
    %36 = vector.shape_cast %33 : vector<8x128xf32> to vector<1x8x128xf32>
    tpu.vector_store %arg4[%c0_14, %c0_15, %c0_16], %36 {strides = array<i32>} : memref<1x8x128xf32, #tpu.memory_space<vmem>>, vector<1x8x128xf32>,
    return
  }
  func.func @transform_0(%arg0: i32) -> (i32, i32) {
    %c0_i32 = arith.constant 0 : i32
    %c0_i32_0 = arith.constant 0 : i32
    return %arg0, %c0_i32 : i32, i32
  }
  func.func @transform_1(%arg0: i32) -> (i32, i32) {
    %c0_i32 = arith.constant 0 : i32
    %c0_i32_0 = arith.constant 0 : i32
    return %arg0, %c0_i32 : i32, i32
  }
  func.func @transform_2(%arg0: i32) -> (i32, i32, i32) {
    %c0_i32 = arith.constant 0 : i32
    %c0_i32_0 = arith.constant 0 : i32
    %c0_i32_1 = arith.constant 0 : i32
    return %arg0, %c0_i32, %c0_i32_0 : i32, i32, i32
  }
  func.func @transform_3(%arg0: i32) -> (i32, i32, i32) {
    %c0_i32 = arith.constant 0 : i32
    %c0_i32_0 = arith.constant 0 : i32
    %c0_i32_1 = arith.constant 0 : i32
    return %arg0, %c0_i32, %c0_i32_0 : i32, i32, i32
  }
}

</mosaic_0001>

<llo_original>
// kernel: tpu_custom_call.1
$region0: #{tpu_custom_call.1}
  #allocation0 [shape = 'u32[]', space=smem, size = 0x4, offset = 0x4, fixed_abs, tag = 'smem constant byte address 0x4 - core index']
  #allocation1 [shape = 'u32[72,128]{1,0:T(1,128)}', space=vmem, size = 0x9000, scoped, tag = 'internal scratch']
  %s0 = inlined_call_operand.hbm [shape: f32[16,128], index: 0, kind: input, shape index: {}]
  %s1 = inlined_call_operand.hbm [shape: f32[16,128], index: 1, kind: input, shape index: {}]
  %s2 = inlined_call_operand.hbm [shape: f32[1,8,128], index: 2, kind: output, shape index: {0}]
  %s3 = inlined_call_operand.hbm [shape: f32[1,8,128], index: 3, kind: output, shape index: {1}]
  %4 = xla_tuple %s2, %s3
  %s5 = sld [smem:[#allocation0]]
  $region34: #{tpu_custom_call.1} parent=0
    _
  %s7 = ssub.s32 1, %s5
  %s8 = scalar_select 0, %s7, %s5
  $region1: #{tpu_custom_call.1} parent=0
    #allocation2 [shape = 'u8[8192]{0}', space=vmem, size = 0x2000, scoped, tag = 'input window, operand 0, single buffered']
    #allocation3 [shape = 's32[1]{0}', space=sflag, size = 0x4, scoped, tag = 'scoped memory for tpu_custom_call.1']
    #allocation4 [shape = 's32[1]{0}', space=sflag, size = 0x4, scoped, tag = 'scoped memory for tpu_custom_call.1']
    #allocation5 [shape = 'u8[8192]{0}', space=vmem, size = 0x2000, scoped, tag = 'input window, operand 1, single buffered']
    #allocation6 [shape = 's32[1]{0}', space=sflag, size = 0x4, scoped, tag = 'scoped memory for tpu_custom_call.1']
    #allocation7 [shape = 'u8[4096]{0}', space=vmem, size = 0x1000, scoped, tag = 'output window, operand 0, single buffered']
    #allocation8 [shape = 'u8[4096]{0}', space=vmem, size = 0x1000, scoped, tag = 'output window, operand 1, single buffered']
    #allocation9 [shape = 's32[1]{0}', space=sflag, size = 0x4, scoped, tag = 'scoped memory for tpu_custom_call.1']
    %9 = vsyncpa [#allocation3], 0
    %10 = vsyncpa [#allocation6], 0
    %11 = vsyncpa [#allocation4], 0
    %12 = vsyncpa [#allocation9], 0
    // Predicated region
    $region2: #{tpu_custom_call.1} parent=1 // pred_check
      _
    $region3: #{tpu_custom_call.1} parent=1 // pred_check_branch
      %14 = sbr.rel (0) target = $region5
    $region4: #{tpu_custom_call.1} parent=1 // pred_region
      %16 = vsyncadd [#allocation3], 0
      %s17 = sshll.u32 %s0, 4
      %s18 = int_to_ptr.hbm [resolvable:$true] %s17
      %s19 = sshll.u32 [#allocation2], 4
      %s20 = int_to_ptr.vmem [resolvable:$true] %s19
      %25 = dma.hbm_to_vmem [thread:$0]  %s18, 256, %s20, [#allocation3], 128, 128, 8
    $region5: #{tpu_custom_call.1} parent=1 // pred_fallthru
      _
    // Predicated region
    $region6: #{tpu_custom_call.1} parent=1 // pred_check
      _
    $region7: #{tpu_custom_call.1} parent=1 // pred_check_branch
      %27 = sbr.rel (0) target = $region9
    $region8: #{tpu_custom_call.1} parent=1 // pred_region
      %29 = vsyncadd [#allocation6], 0
      %s30 = sshll.u32 %s1, 4
      %s31 = int_to_ptr.hbm [resolvable:$true] %s30
      %s32 = sshll.u32 [#allocation5], 4
      %s33 = int_to_ptr.vmem [resolvable:$true] %s32
      %38 = dma.hbm_to_vmem [thread:$0]  %s31, 256, %s33, [#allocation6], 128, 128, 8
    $region9: #{tpu_custom_call.1} parent=1 // pred_fallthru
      _
    // Predicated region
    $region10: #{tpu_custom_call.1} parent=1 // pred_check
      _
    $region11: #{tpu_custom_call.1} parent=1 // pred_check_branch
      %40 = sbr.rel (0) target = $region13
    $region12: #{tpu_custom_call.1} parent=1 // pred_region
      %42 = dma.done [#allocation3], 256
    $region13: #{tpu_custom_call.1} parent=1 // pred_fallthru
      _
    // Predicated region
    $region14: #{tpu_custom_call.1} parent=1 // pred_check
      _
    $region15: #{tpu_custom_call.1} parent=1 // pred_check_branch
      %44 = sbr.rel (0) target = $region17
    $region16: #{tpu_custom_call.1} parent=1 // pred_region
      %46 = dma.done [#allocation6], 256
    $region17: #{tpu_custom_call.1} parent=1 // pred_fallthru
      _
    %v47 = vld [vmem:[#allocation2] sm:$0xff]
    %v48 = vld [vmem:[#allocation2 + $0x8] sm:$0xff]
    %v49 = vld [vmem:[#allocation5] sm:$0xff]
    %v50 = vld [vmem:[#allocation5 + $0x8] sm:$0xff]
    %vm51 = vcmp.eq.f32.partialorder %v49, 1.0
    %vm52 = vcmp.eq.f32.partialorder %v50, 1.0
    %vm53 = vcmp.lt.f32.partialorder %v49, 1.0
    %vm54 = vcmp.lt.f32.partialorder %v50, 1.0
    %v55 = vmax.f32 %v47, 1e-06
    %v56 = vmax.f32 %v48, 1e-06
    %v57 = vmin.f32 %v55, 0.999999
    %v58 = vmin.f32 %v56, 0.999999
    %v59 = vsub.f32 1.0, %v57
    %v60 = vsub.f32 1.0, %v58
    %v61 = vsel %vm51, %v57, %v59
    %v62 = vsel %vm52, %v58, %v60
    %v63 = vmul.f32 %v59, %v59
    %v64 = vmul.f32 %v60, %v60
    %v65 = vsub.f32 1.0, %v49
    %v66 = vsub.f32 1.0, %v50
    %v67 = vmul.f32 %v65, %v65
    %v68 = vmul.f32 %v66, %v66
    %v69 = vmul.f32 %v67, %v67
    %v70 = vmul.f32 %v68, %v68
    %v71 = vmul.f32 %v69, %v57
    %v72 = vmul.f32 %v70, %v58
    %v73 = vmul.f32 %v71, %v57
    %v74 = vmul.f32 %v72, %v58
    %v75 = vsel %vm53, %v73, 0.0
    %v76 = vsel %vm54, %v74, 0.0
    %v77 = vsel %vm51, %v63, %v75
    %v78 = vsel %vm52, %v64, %v76
    %v79 = vlog2.pop %v61
    %v80 = vmul.f32 %v79, 0.6931472
    %v81 = vlog2.pop %v62
    %v82 = vmul.f32 %v81, 0.6931472
    %v83 = vmul.f32 %v80, %v77
    %v84 = vmul.f32 %v82, %v78
    %v85 = vsel %vm51, 1, 0
    %v86 = vsel %vm52, 1, 0
    %v87 = vcvt.s32.f32 %v85
    %v88 = vcvt.s32.f32 %v86
    %v89 = vadd.f32 %v83, %v84
    %90 = vst [vmem:[#allocation7] sm:$0xff] %v89
    %v91 = vadd.f32 %v87, %v88
    %92 = vst [vmem:[#allocation8] sm:$0xff] %v91
    // Predicated region
    $region18: #{tpu_custom_call.1} parent=1 // pred_check
      _
    $region19: #{tpu_custom_call.1} parent=1 // pred_check_branch
      %94 = sbr.rel (0) target = $region21
    $region20: #{tpu_custom_call.1} parent=1 // pred_region
      %96 = vsyncadd [#allocation4], 0
      %s98 = sshll.u32 [#allocation7], 4
      %s99 = int_to_ptr.vmem [resolvable:$true] %s98
      %s100 = sshll.u32 %s2, 4
      %s101 = int_to_ptr.hbm [resolvable:$true] %s100
      %103 = dma.vmem_to_hbm [thread:$0]  %s99, 128, %s101, [#allocation4]
    $region21: #{tpu_custom_call.1} parent=1 // pred_fallthru
      _
    // Predicated region
    $region22: #{tpu_custom_call.1} parent=1 // pred_check
      _
    $region23: #{tpu_custom_call.1} parent=1 // pred_check_branch
      %105 = sbr.rel (0) target = $region25
    $region24: #{tpu_custom_call.1} parent=1 // pred_region
      %107 = vsyncadd [#allocation9], 0
      %s109 = sshll.u32 [#allocation8], 4
      %s110 = int_to_ptr.vmem [resolvable:$true] %s109
      %s111 = sshll.u32 %s3, 4
      %s112 = int_to_ptr.hbm [resolvable:$true] %s111
      %114 = dma.vmem_to_hbm [thread:$0]  %s110, 128, %s112, [#allocation9]
    $region25: #{tpu_custom_call.1} parent=1 // pred_fallthru
      _
    // Predicated region
    $region26: #{tpu_custom_call.1} parent=1 // pred_check
      _
    $region27: #{tpu_custom_call.1} parent=1 // pred_check_branch
      %116 = sbr.rel (0) target = $region29
    $region28: #{tpu_custom_call.1} parent=1 // pred_region
      %118 = dma.done [#allocation4], 128
    $region29: #{tpu_custom_call.1} parent=1 // pred_fallthru
      _
    // Predicated region
    $region30: #{tpu_custom_call.1} parent=1 // pred_check
      _
    $region31: #{tpu_custom_call.1} parent=1 // pred_check_branch
      %120 = sbr.rel (0) target = $region33
    $region32: #{tpu_custom_call.1} parent=1 // pred_region
      %122 = dma.done [#allocation9], 128
    $region33: #{tpu_custom_call.1} parent=1 // pred_fallthru
      _
    %123 = vsyncpa [#allocation3], 1
    %124 = vsyncpa [#allocation6], 1
    %125 = vsyncpa [#allocation4], 1
    %126 = vsyncpa [#allocation9], 1

</llo_original>
